<compile_context>
chip_gen: v7x
topology: tpu7x:2x2x1
jax: 0.10.0
libtpu: 0.0.40
codegen_flags: <defaults>
</compile_context>

<pallas_src>
import functools

import jax
import jax.numpy as jnp
from jax import lax
from jax.experimental import pallas as pl
from jax.experimental.pallas import tpu as pltpu


def _round_up(x, m):
    return (x + m - 1) // m * m


def _vmem_capacity_bytes():
    """Physical VMEM of the attached TPU; conservative (v7x, 64 MiB) fallback."""
    try:
        return int(pltpu.get_tpu_info().vmem_capacity_bytes)
    except Exception:
        return 64 * 1024 * 1024


# ---------------------------------------------------------------------------
# Pallas kernel: conv (im2col matmul) + ReLU + global-avg-pool + linear, fused
# ---------------------------------------------------------------------------

def encoder_kernel(p_ref, w_ref, lw_ref, lb_ref, o_ref, acc_ref):
    """Grid: (batch b, spatial-tile s); s is the reduction ("arbitrary") axis.

      p_ref  : [S_TILE, K_pad] bf16  patch rows of one spatial tile of image b
                                     (column K holds 1.0 -> folded conv bias)
      w_ref  : [K_pad, N_pad] bf16   flattened conv weights (row K = conv bias),
                                     VMEM-resident across the whole grid
      lw_ref : [N_pad, E_pad] f32    linear weight with 1/(OH*OW) pre-folded
      lb_ref : [1, E_pad]     f32    linear bias
      o_ref  : [1, 1, E_pad]  f32    embedding for image b
      acc_ref: VMEM (1, N_pad) f32   pooled-feature accumulator (lives across s)
    """
    s = pl.program_id(1)

    @pl.when(s == 0)
    def _():
        acc_ref[...] = jnp.zeros_like(acc_ref)

    # Conv as im2col matmul on the MXU (bf16 in, f32 accumulate).  The bias
    # arrives through the ones-column, so zero-padded spatial rows produce
    # exactly zero after ReLU and never perturb the pooled sum.
    feat = jnp.dot(p_ref[...], w_ref[...], preferred_element_type=jnp.float32)
    feat = jnp.maximum(feat, 0.0)
    acc_ref[...] += jnp.sum(feat, axis=0, keepdims=True)

    @pl.when(s == pl.num_programs(1) - 1)
    def _():
        # Linear projection fused into the epilogue; 1/(OH*OW) is folded into
        # lw_ref, so the spatial SUM accumulator becomes the average for free.
        o_ref[0] = (
            jnp.dot(acc_ref[...], lw_ref[...], preferred_element_type=jnp.float32)
            + lb_ref[...]
        )


# ---------------------------------------------------------------------------
# Wrapper (glue reshapes/padding in plain JAX, all compute in the kernel)
# ---------------------------------------------------------------------------

def encoder_forward(x, params, *, spatial_tile_cap=2048):
    """x: [B, C_in, H, W] (NCHW, PyTorch convention) -> [B, 1, embed_dim]."""
    conv_w, conv_b = params["conv_w"], params["conv_b"]
    lin_w, lin_b = params["lin_w"], params["lin_b"]

    B, C_in, H, W = x.shape
    C_out = conv_w.shape[0]
    E = lin_w.shape[0]
    k, stride, pad = 3, 2, 1
    OH = (H + 2 * pad - k) // stride + 1
    OW = (W + 2 * pad - k) // stride + 1
    HW = OH * OW
    K = C_in * k * k

    # ---- padded / tiled sizes ------------------------------------------------
    K_pad = _round_up(K + 1, 16)     # +1 = folded-bias column; bf16 sublane mult
    N_pad = _round_up(C_out, 128)    # lane-dense feature channels
    E_pad = _round_up(E, 128)        # lane-dense embedding

    # Byte-derived spatial tile: double-buffered bf16 patch rows get ~1/4 of
    # physical VMEM (64 MiB v7x, 128 MiB v5e/v6e); capped to bound per-step
    # latency, floored at the bf16 sublane-packing minimum of 16 rows.
    vmem_cap = _vmem_capacity_bytes()
    rows_cap = (vmem_cap // 4) // (2 * K_pad * 2)
    S_TILE = min(rows_cap, spatial_tile_cap, _round_up(HW, 16))
    S_TILE = max(16, (S_TILE // 16) * 16)
    HW_pad = _round_up(HW, S_TILE)   # pad the spatial axis; extra rows are zero
    S_TILES = HW_pad // S_TILE

    # ---- im2col patches, channels-last; conv bias folded via a ones column ----
    patches = lax.conv_general_dilated_patches(
        x, (k, k), (stride, stride), ((pad, pad), (pad, pad)),
        dimension_numbers=("NCHW", "OIHW", "NHWC"),
    ).reshape(B, HW, K)
    ones = jnp.ones((B, HW, 1), patches.dtype)
    patches = jnp.concatenate([patches, ones], axis=-1)            # [B, HW, K+1]
    patches = jnp.pad(patches, ((0, 0), (0, HW_pad - HW), (0, K_pad - K - 1)))
    patches = patches.reshape(B * HW_pad, K_pad).astype(jnp.bfloat16)

    w_mat = jnp.concatenate(
        [conv_w.reshape(C_out, K).T, conv_b[None, :]], axis=0)     # [K+1, C_out]
    w_mat = jnp.pad(w_mat, ((0, K_pad - K - 1), (0, N_pad - C_out)))
    w_mat = w_mat.astype(jnp.bfloat16)                             # [K_pad, N_pad]

    # Linear weight stays f32 (tiny, VMEM-resident); 1/(OH*OW) folded in.
    lin_w_mat = jnp.pad(lin_w.T, ((0, N_pad - C_out), (0, E_pad - E))) * (1.0 / HW)
    lin_b_mat = jnp.pad(lin_b, (0, E_pad - E)).reshape(1, E_pad)

    # ---- VMEM budget / cost estimate ------------------------------------------
    needed = (2 * S_TILE * K_pad * 2          # double-buffered bf16 patch tile
              + 2 * K_pad * N_pad * 2         # conv weight (resident)
              + 2 * N_pad * E_pad * 4         # linear weight (resident)
              + 4 * E_pad * 4                 # linear bias + output block
              + N_pad * 4)                    # f32 accumulator scratch
    vmem_limit = int(min(max(2 * needed, 16 * 1024 * 1024), 48 * 1024 * 1024))

    cost = pl.CostEstimate(
        flops=2 * B * HW_pad * K_pad * N_pad + 2 * B * N_pad * E_pad,
        transcendentals=0,
        bytes_accessed=(2 * B * HW_pad * K_pad          # bf16 patches, read once
                        + 2 * K_pad * N_pad             # bf16 conv weight
                        + 4 * N_pad * E_pad             # f32 linear weight
                        + 4 * E_pad + 4 * B * E_pad),   # bias + output
    )

    emb = pl.pallas_call(
        encoder_kernel,
        out_shape=jax.ShapeDtypeStruct((B, 1, E_pad), jnp.float32),
        grid_spec=pltpu.PrefetchScalarGridSpec(
            num_scalar_prefetch=0,
            grid=(B, S_TILES),
            in_specs=[
                pl.BlockSpec((S_TILE, K_pad), lambda b, s: (b * S_TILES + s, 0)),
                pl.BlockSpec((K_pad, N_pad), lambda b, s: (0, 0)),
                pl.BlockSpec((N_pad, E_pad), lambda b, s: (0, 0)),
                pl.BlockSpec((1, E_pad), lambda b, s: (0, 0)),
            ],
            out_specs=pl.BlockSpec((1, 1, E_pad), lambda b, s: (b, 0, 0)),
            scratch_shapes=[pltpu.VMEM((1, N_pad), jnp.float32)],
        ),
        compiler_params=pltpu.CompilerParams(
            dimension_semantics=("parallel", "arbitrary"),
            vmem_limit_bytes=vmem_limit,
        ),
        cost_estimate=cost,
    )(patches, w_mat, lin_w_mat, lin_b_mat)                        # [B, 1, E_pad]

    return emb[:, :, :E]                                           # [B, 1, embed_dim]


# ---------------------------------------------------------------------------
# Main
# ---------------------------------------------------------------------------

if __name__ == "__main__":
    key = jax.random.PRNGKey(0)
    k_x, k_cw, k_cb, k_lw, k_lb = jax.random.split(key, 5)

    B, C_in, H, W = 2, 3, 14, 14      # small synthetic image batch (NCHW)
    C_feat = 64                        # stand-in for resnet's 2048 features
    embed_dim = 32

    x = jax.random.normal(k_x, (B, C_in, H, W), dtype=jnp.float32)
    params = {
        "conv_w": jax.random.normal(k_cw, (C_feat, C_in, 3, 3), jnp.float32) * 0.1,
        "conv_b": jax.random.normal(k_cb, (C_feat,), jnp.float32) * 0.1,
        "lin_w":  jax.random.normal(k_lw, (embed_dim, C_feat), jnp.float32) * 0.1,
        "lin_b":  jax.random.normal(k_lb, (embed_dim,), jnp.float32) * 0.1,
    }

    # Small spatial-tile cap at toy scale so the fused-pool reduction axis has
    # several steps (exercises pl.when init/finalize AND the padded-remainder
    # rows: HW = 7*7 = 49 -> padded to 64); at real scale use the default cap.
    fwd = jax.jit(functools.partial(encoder_forward, spatial_tile_cap=16))
    out = jax.block_until_ready(fwd(x, params))
    assert out.shape == (B, 1, embed_dim), out.shape

    # Pure-JAX reference check (bf16-rounded conv inputs to match kernel dtype).
    xb = x.astype(jnp.bfloat16).astype(jnp.float32)
    wb = params["conv_w"].astype(jnp.bfloat16).astype(jnp.float32)
    bb = params["conv_b"].astype(jnp.bfloat16).astype(jnp.float32)
    ref_h = lax.conv_general_dilated(
        xb, wb, window_strides=(2, 2), padding=((1, 1), (1, 1)),
        dimension_numbers=("NCHW", "OIHW", "NCHW"))
    ref_h = jnp.maximum(ref_h + bb[None, :, None, None], 0.0)
    ref = jnp.mean(ref_h, axis=(2, 3)) @ params["lin_w"].T + params["lin_b"]
    ref = ref[:, None, :]
    assert jnp.allclose(out, ref, atol=1e-2, rtol=1e-2), "mismatch vs reference"

    print("KERNEL_OK")
</pallas_src>

<mosaic_0001>
module attributes {stable_mosaic.version = 11 : i64} {
  func.func @encoder_kernel(%arg0: i32, %arg1: i32, %arg2: memref<16x32xbf16, #tpu.memory_space<vmem>>, %arg3: memref<32x128xbf16, #tpu.memory_space<vmem>>, %arg4: memref<128x128xf32, #tpu.memory_space<vmem>>, %arg5: memref<1x128xf32, #tpu.memory_space<vmem>>, %arg6: memref<1x1x128xf32, #tpu.memory_space<vmem>>, %arg7: memref<1x128xf32, #tpu.memory_space<vmem>>) attributes {dimension_semantics = [#tpu.dimension_semantics<parallel>, #tpu.dimension_semantics<arbitrary>], iteration_bounds = array<i64: 2, 4>, scalar_prefetch = 0 : i64, scratch_operands = 1 : i64, tpu.core_type = #tpu.core_type<tc>, window_params = [{transform_indices = @transform_0, window_bounds = array<i64: 16, 32>}, {pipeline_mode = #tpu.pipeline_mode<synchronous>, transform_indices = @transform_1, window_bounds = array<i64: 32, 128>}, {pipeline_mode = #tpu.pipeline_mode<synchronous>, transform_indices = @transform_2, window_bounds = array<i64: 128, 128>}, {pipeline_mode = #tpu.pipeline_mode<synchronous>, transform_indices = @transform_3, window_bounds = array<i64: 1, 128>}, {transform_indices = @transform_4, window_bounds = array<i64: 1, 1, 128>}]} {
    %c0_i32 = arith.constant 0 : i32
    %0 = arith.cmpi eq, %arg1, %c0_i32 : i32
    %1 = arith.extui %0 : i1 to i32
    %c0_i32_0 = arith.constant 0 : i32
    %2 = arith.cmpi ne, %1, %c0_i32_0 : i32
    scf.if %2 {
      %cst_11 = arith.constant 0.000000e+00 : f32
      %16 = vector.broadcast %cst_11 : f32 to vector<1x128xf32>
      %c0_12 = arith.constant 0 : index
      %c0_13 = arith.constant 0 : index
      %17 = vector.load %arg7[%c0_12, %c0_13] : memref<1x128xf32, #tpu.memory_space<vmem>>, vector<1x128xf32>
      tpu.vector_store %arg7[%c0_12, %c0_13], %16 {strides = array<i32>} : memref<1x128xf32, #tpu.memory_space<vmem>>, vector<1x128xf32>,
    } else {
    }
    %c0 = arith.constant 0 : index
    %c0_1 = arith.constant 0 : index
    %3 = vector.load %arg2[%c0, %c0_1] : memref<16x32xbf16, #tpu.memory_space<vmem>>, vector<16x32xbf16>
    %c0_2 = arith.constant 0 : index
    %c0_3 = arith.constant 0 : index
    %4 = vector.load %arg3[%c0_2, %c0_3] : memref<32x128xbf16, #tpu.memory_space<vmem>>, vector<32x128xbf16>
    %cst = arith.constant dense<0.000000e+00> : vector<16x128xf32>
    %5 = tpu.matmul %3, %4, %cst {dimension_numbers = #tpu.dot_dimension_numbers<[1], [0], [0], [1], [0, 0, 1, 1], [], []>} : vector<16x32xbf16>, vector<32x128xbf16>, vector<16x128xf32> -> vector<16x128xf32>
    %cst_4 = arith.constant 0.000000e+00 : f32
    %6 = vector.broadcast %cst_4 : f32 to vector<16x128xf32>
    %7 = arith.maximumf %5, %6 : vector<16x128xf32>
    %c0_5 = arith.constant 0 : index
    %c0_6 = arith.constant 0 : index
    %8 = vector.load %arg7[%c0_5, %c0_6] : memref<1x128xf32, #tpu.memory_space<vmem>>, vector<1x128xf32>
    %cst_7 = arith.constant dense<0.000000e+00> : vector<128xf32>
    %9 = vector.multi_reduction <add>, %7, %cst_7 [0] : vector<16x128xf32> to vector<128xf32>
    %10 = vector.shape_cast %9 : vector<128xf32> to vector<1x128xf32>
    %11 = arith.addf %8, %10 : vector<1x128xf32>
    %c0_8 = arith.constant 0 : index
    %c0_9 = arith.constant 0 : index
    %12 = vector.load %arg7[%c0_8, %c0_9] : memref<1x128xf32, #tpu.memory_space<vmem>>, vector<1x128xf32>
    tpu.vector_store %arg7[%c0_8, %c0_9], %11 {strides = array<i32>} : memref<1x128xf32, #tpu.memory_space<vmem>>, vector<1x128xf32>,
    %c3_i32 = arith.constant 3 : i32
    %13 = arith.cmpi eq, %arg1, %c3_i32 : i32
    %14 = arith.extui %13 : i1 to i32
    %c0_i32_10 = arith.constant 0 : i32
    %15 = arith.cmpi ne, %14, %c0_i32_10 : i32
    scf.if %15 {
      %c0_11 = arith.constant 0 : index
      %c0_12 = arith.constant 0 : index
      %16 = vector.load %arg7[%c0_11, %c0_12] : memref<1x128xf32, #tpu.memory_space<vmem>>, vector<1x128xf32>
      %c0_13 = arith.constant 0 : index
      %c0_14 = arith.constant 0 : index
      %17 = vector.load %arg4[%c0_13, %c0_14] : memref<128x128xf32, #tpu.memory_space<vmem>>, vector<128x128xf32>
      %cst_15 = arith.constant dense<0.000000e+00> : vector<1x128xf32>
      %18 = tpu.matmul %16, %17, %cst_15 {dimension_numbers = #tpu.dot_dimension_numbers<[1], [0], [0], [1], [0, 0, 1, 1], [], []>} : vector<1x128xf32>, vector<128x128xf32>, vector<1x128xf32> -> vector<1x128xf32>
      %c0_16 = arith.constant 0 : index
      %c0_17 = arith.constant 0 : index
      %19 = vector.load %arg5[%c0_16, %c0_17] : memref<1x128xf32, #tpu.memory_space<vmem>>, vector<1x128xf32>
      %20 = arith.addf %18, %19 : vector<1x128xf32>
      %c0_18 = arith.constant 0 : index
      %c0_19 = arith.constant 0 : index
      %c0_20 = arith.constant 0 : index
      %21 = vector.load %arg6[%c0_18, %c0_19, %c0_20] : memref<1x1x128xf32, #tpu.memory_space<vmem>>, vector<1x1x128xf32>
      %22 = vector.shape_cast %21 : vector<1x1x128xf32> to vector<1x128xf32>
      %23 = vector.shape_cast %20 : vector<1x128xf32> to vector<1x1x128xf32>
      tpu.vector_store %arg6[%c0_18, %c0_19, %c0_20], %23 {strides = array<i32>} : memref<1x1x128xf32, #tpu.memory_space<vmem>>, vector<1x1x128xf32>,
    } else {
    }
    return
  }
  func.func @transform_0(%arg0: i32, %arg1: i32) -> (i32, i32) {
    %c4_i32 = arith.constant 4 : i32
    %0 = arith.muli %arg0, %c4_i32 : i32
    %1 = arith.addi %0, %arg1 : i32
    %c0_i32 = arith.constant 0 : i32
    %c0_i32_0 = arith.constant 0 : i32
    return %1, %c0_i32 : i32, i32
  }
  func.func @transform_1(%arg0: i32, %arg1: i32) -> (i32, i32) {
    %c0_i32 = arith.constant 0 : i32
    %c0_i32_0 = arith.constant 0 : i32
    %c0_i32_1 = arith.constant 0 : i32
    return %c0_i32, %c0_i32_0 : i32, i32
  }
  func.func @transform_2(%arg0: i32, %arg1: i32) -> (i32, i32) {
    %c0_i32 = arith.constant 0 : i32
    %c0_i32_0 = arith.constant 0 : i32
    %c0_i32_1 = arith.constant 0 : i32
    return %c0_i32, %c0_i32_0 : i32, i32
  }
  func.func @transform_3(%arg0: i32, %arg1: i32) -> (i32, i32) {
    %c0_i32 = arith.constant 0 : i32
    %c0_i32_0 = arith.constant 0 : i32
    %c0_i32_1 = arith.constant 0 : i32
    return %c0_i32, %c0_i32_0 : i32, i32
  }
  func.func @transform_4(%arg0: i32, %arg1: i32) -> (i32, i32, i32) {
    %c0_i32 = arith.constant 0 : i32
    %c0_i32_0 = arith.constant 0 : i32
    %c0_i32_1 = arith.constant 0 : i32
    return %arg0, %c0_i32, %c0_i32_0 : i32, i32, i32
  }
}

</mosaic_0001>

<llo_original>
// kernel: encoder_forward.1
$region0: #{encoder_forward.1}
  #allocation0 [shape = 'u32[]', space=smem, size = 0x4, offset = 0x4, fixed_abs, tag = 'smem constant byte address 0x4 - core index']
  #allocation1 [shape = 'u32[144,128]{1,0:T(1,128)}', space=vmem, size = 0x12000, scoped, tag = 'internal scratch']
  #allocation2 [shape = 'f32[1,128]{1,0:T(1,128)}', space=vmem, size = 0x200, scoped, tag = 'scratch operand']
  %s0 = inlined_call_operand.vmem [shape: bf16[128,32], index: 0, kind: input, shape index: {}]
  %s1 = inlined_call_operand.vmem [shape: bf16[32,128], index: 1, kind: input, shape index: {}]
  %s2 = inlined_call_operand.vmem [shape: f32[128,128], index: 2, kind: input, shape index: {}]
  %s3 = inlined_call_operand.vmem [shape: f32[1,128], index: 3, kind: input, shape index: {}]
  %s4 = inlined_call_operand.hbm [shape: f32[2,1,128], index: 4, kind: output, shape index: {}]
  %s5 = sld [smem:[#allocation0]]
  $region57: #{encoder_forward.1} parent=0
    _
  %s7 = ssub.s32 1, %s5
  %s8 = scalar_select 0, %s7, %s5
  $region1: #{encoder_forward.1} parent=0
    #allocation3 [shape = 'u8[1024]{0}', space=vmem, size = 0x400, scoped, tag = 'output window, operand 0']
    #allocation4 [shape = 's32[2]{0}', space=sflag, size = 0x8, scoped, tag = 'scoped memory for encoder_forward.1']
    %9 = vsyncpa [#allocation4], 0
    %s10 = scalar_lea.sflag [#allocation4], 1
    %11 = vsyncpa %s10, 0
    loop: start=0, step=1, limit=10
    $region2: #{encoder_forward.1} parent=1 // loop_pre_header
      _
    $region3: #{encoder_forward.1} parent=1 // loop_header
      %s13 = sphi 0, %s17
      %p14 = scmp.ge.s32.totalorder %s13, 10
      %s20 = sphi 0, %s32
      %s21 = sphi 0, %s28
      %s22 = sphi 0, %s20
      %s23 = sphi 0, %s21
      %s24 = sphi 0, %s22
      %s25 = sphi 0, %s23
      %s39 = sphi 0, %s41
      %s42 = sphi 0, %s39
      %s43 = sphi 0, %s42
      %s59 = sphi 0, %s43
      %s63 = sphi 0, %s63
      %s65 = sphi 0, %s63
      %s66 = sphi 0, %s65
      %s80 = sphi 0, %s66
      %s84 = sphi 0, %s84
      %s86 = sphi 0, %s84
      %s87 = sphi 0, %s86
      %s101 = sphi 0, %s87
      %s105 = sphi 0, %s105
      %s107 = sphi 0, %s105
      %s108 = sphi 0, %s107
      %s122 = sphi 0, %s108
      %s128 = sphi 0, %s130
      %s131 = sphi 0, %s128
      %s132 = sphi 0, %s131
      %s148 = sphi 0, %s132
    $region4: #{encoder_forward.1} parent=1 // loop_header_branch
      %16 = sbr.rel (%p14) target = $region8
    $region5: #{encoder_forward.1} parent=1 // loop_body
      %s18 = ssub.s32 %s13, 1
      %s19 = ssub.s32 %s13, 2
      %s26 = sadd.s32 1, %s21
      %p27 = scmp.ge.s32.totalorder %s26, 4
      %s28 = scalar_select %p27, 0, %s26
      %s29 = sadd.s32 1, %s20
      %s30 = scalar_select %p27, %s29, %s20
      %p31 = scmp.ge.s32.totalorder %s30, 2
      %s32 = scalar_select %p31, 0, %s30
      %s33 = smul.u32 %s20, 4
      %s34 = sadd.s32 %s33, %s21
      %s35 = smul.u32 %s32, 4
      %s36 = sadd.s32 %s35, %s28
      %s37 = ssub.s32 %s34, %s36
      %p38 = scmp.eq.s32.totalorder %s37, 0
      %s40 = sadd.s32 %s39, 1
      %s41 = scalar_select %p38, %s39, %s40
      %p44 = pneg %p38
      %p45 = scmp.eq.s32.totalorder %s13, 7
      %p46 = por %p44, %p45
      %p47 = scmp.ne.s32.totalorder %s39, %s42
      %p48 = scmp.eq.s32.totalorder %s13, 0
      %p49 = por %p47, %p48
      %p50 = scmp.ne.s32.totalorder %s39, %s42
      %p51 = scmp.eq.s32.totalorder %s18, 7
      %p52 = por %p50, %p51
      %p53 = scmp.ne.s32.totalorder %s42, %s43
      %p54 = scmp.eq.s32.totalorder %s18, 0
      %p55 = por %p53, %p54
      %p56 = scmp.ne.s32.totalorder %s42, %s43
      %p57 = scmp.eq.s32.totalorder %s19, 7
      %p58 = por %p56, %p57
      %p60 = scmp.ne.s32.totalorder %s43, %s59
      %p61 = scmp.eq.s32.totalorder %s19, 0
      %p62 = por %p60, %p61
      %s64 = sadd.s32 %s63, 1
      %p67 = scmp.eq.s32.totalorder %s13, 7
      %p68 = scmp.ne.s32.totalorder %s63, %s65
      %p69 = scmp.eq.s32.totalorder %s13, 0
      %p70 = por %p68, %p69
      %p71 = scmp.ne.s32.totalorder %s63, %s65
      %p72 = scmp.eq.s32.totalorder %s18, 7
      %p73 = por %p71, %p72
      %p74 = scmp.ne.s32.totalorder %s65, %s66
      %p75 = scmp.eq.s32.totalorder %s18, 0
      %p76 = por %p74, %p75
      %p77 = scmp.ne.s32.totalorder %s65, %s66
      %p78 = scmp.eq.s32.totalorder %s19, 7
      %p79 = por %p77, %p78
      %p81 = scmp.ne.s32.totalorder %s66, %s80
      %p82 = scmp.eq.s32.totalorder %s19, 0
      %p83 = por %p81, %p82
      %s85 = sadd.s32 %s84, 1
      %p88 = scmp.eq.s32.totalorder %s13, 7
      %p89 = scmp.ne.s32.totalorder %s84, %s86
      %p90 = scmp.eq.s32.totalorder %s13, 0
      %p91 = por %p89, %p90
      %p92 = scmp.ne.s32.totalorder %s84, %s86
      %p93 = scmp.eq.s32.totalorder %s18, 7
      %p94 = por %p92, %p93
      %p95 = scmp.ne.s32.totalorder %s86, %s87
      %p96 = scmp.eq.s32.totalorder %s18, 0
      %p97 = por %p95, %p96
      %p98 = scmp.ne.s32.totalorder %s86, %s87
      %p99 = scmp.eq.s32.totalorder %s19, 7
      %p100 = por %p98, %p99
      %p102 = scmp.ne.s32.totalorder %s87, %s101
      %p103 = scmp.eq.s32.totalorder %s19, 0
      %p104 = por %p102, %p103
      %s106 = sadd.s32 %s105, 1
      %p109 = scmp.eq.s32.totalorder %s13, 7
      %p110 = scmp.ne.s32.totalorder %s105, %s107
      %p111 = scmp.eq.s32.totalorder %s13, 0
      %p112 = por %p110, %p111
      %p113 = scmp.ne.s32.totalorder %s105, %s107
      %p114 = scmp.eq.s32.totalorder %s18, 7
      %p115 = por %p113, %p114
      %p116 = scmp.ne.s32.totalorder %s107, %s108
      %p117 = scmp.eq.s32.totalorder %s18, 0
      %p118 = por %p116, %p117
      %p119 = scmp.ne.s32.totalorder %s107, %s108
      %p120 = scmp.eq.s32.totalorder %s19, 7
      %p121 = por %p119, %p120
      %p123 = scmp.ne.s32.totalorder %s108, %s122
      %p124 = scmp.eq.s32.totalorder %s19, 0
      %p125 = por %p123, %p124
      %s126 = ssub.s32 %s20, %s32
      %p127 = scmp.eq.s32.totalorder %s126, 0
      %s129 = sadd.s32 %s128, 1
      %s130 = scalar_select %p127, %s128, %s129
      %p133 = pneg %p127
      %p134 = scmp.eq.s32.totalorder %s13, 7
      %p135 = por %p133, %p134
      %p136 = scmp.ne.s32.totalorder %s128, %s131
      %p137 = scmp.eq.s32.totalorder %s13, 0
      %p138 = por %p136, %p137
      %p139 = scmp.ne.s32.totalorder %s128, %s131
      %p140 = scmp.eq.s32.totalorder %s18, 7
      %p141 = por %p139, %p140
      %p142 = scmp.ne.s32.totalorder %s131, %s132
      %p143 = scmp.eq.s32.totalorder %s18, 0
      %p144 = por %p142, %p143
      %p145 = scmp.ne.s32.totalorder %s131, %s132
      %p146 = scmp.eq.s32.totalorder %s19, 7
      %p147 = por %p145, %p146
      %p149 = scmp.ne.s32.totalorder %s132, %s148
      %p150 = scmp.eq.s32.totalorder %s19, 0
      %p151 = por %p149, %p150
      %p152 = scmp.le.s32.totalorder 1, %s13
      %p153 = scmp.lt.s32.totalorder %s13, 9
      %p154 = pnand %p152, %p153
      %p155 = pneg %p154
      // Predicated region
      $region9: #{encoder_forward.1} parent=5 // pred_check
        _
      $region10: #{encoder_forward.1} parent=5 // pred_check_branch
        %157 = sbr.rel (%p154) target = $region12
      $region11: #{encoder_forward.1} parent=5 // pred_region
        %s158 = ssub.s32 %s13, 1
        // Predicated region
        $region13: #{encoder_forward.1} parent=11 // pred_check
          %p159 = pneg %p76
        $region14: #{encoder_forward.1} parent=11 // pred_check_branch
          %161 = sbr.rel (%p159) target = $region16
        $region15: #{encoder_forward.1} parent=11 // pred_region
          _
        $region16: #{encoder_forward.1} parent=11 // pred_fallthru
          _
        // Predicated region
        $region17: #{encoder_forward.1} parent=11 // pred_check
          %p162 = pneg %p97
        $region18: #{encoder_forward.1} parent=11 // pred_check_branch
          %164 = sbr.rel (%p162) target = $region20
        $region19: #{encoder_forward.1} parent=11 // pred_region
          _
        $region20: #{encoder_forward.1} parent=11 // pred_fallthru
          _
        // Predicated region
        $region21: #{encoder_forward.1} parent=11 // pred_check
          %p165 = pneg %p118
        $region22: #{encoder_forward.1} parent=11 // pred_check_branch
          %167 = sbr.rel (%p165) target = $region24
        $region23: #{encoder_forward.1} parent=11 // pred_region
          _
        $region24: #{encoder_forward.1} parent=11 // pred_fallthru
          _
      $region12: #{encoder_forward.1} parent=5 // pred_fallthru
        _
      %p168 = scmp.lt.s32.totalorder %s13, 8
      // Predicated region
      $region25: #{encoder_forward.1} parent=5 // pred_check
        %p169 = pneg %p168
      $region26: #{encoder_forward.1} parent=5 // pred_check_branch
        %171 = sbr.rel (%p169) target = $region28
      $region27: #{encoder_forward.1} parent=5 // pred_region
        // Predicated region
        $region29: #{encoder_forward.1} parent=27 // pred_check
          %p172 = pneg %p49
        $region30: #{encoder_forward.1} parent=27 // pred_check_branch
          %174 = sbr.rel (%p172) target = $region32
        $region31: #{encoder_forward.1} parent=27 // pred_region
          %s175 = smul.u32 %s20, 4
          %s176 = sadd.s32 %s175, %s21
          %s177 = smul.u32 2, %s176
          %p178 = scmp.lt.s32.totalorder %s177, 15
          %s179 = scalar_select %p178, %s177, 15
          %s180 = smul.addr %s179, 4
          %s181 = scalar_lea.vmem %s0, %s180
          %s182 = smul.u32 %s20, 4
          %s183 = sadd.s32 %s182, %s21
          %s184 = smul.u32 2, %s183
        $region32: #{encoder_forward.1} parent=27 // pred_fallthru
          _
      $region28: #{encoder_forward.1} parent=5 // pred_fallthru
        _
      %p185 = scmp.le.s32.totalorder 1, %s13
      %p186 = scmp.lt.s32.totalorder %s13, 9
      %p187 = pnand %p185, %p186
      %p188 = pneg %p187
      // Predicated region
      $region33: #{encoder_forward.1} parent=5 // pred_check
        _
      $region34: #{encoder_forward.1} parent=5 // pred_check_branch
        %190 = sbr.rel (%p187) target = $region36
      $region35: #{encoder_forward.1} parent=5 // pred_region
        %s191 = ssub.s32 %s13, 1
        %s192 = smul.u32 %s22, 4
        %s193 = sadd.s32 %s192, %s23
        %s194 = smul.u32 2, %s193
        %p195 = scmp.lt.s32.totalorder %s194, 15
        %s196 = scalar_select %p195, %s194, 15
        %s197 = smul.addr %s196, 4
        %s198 = scalar_lea.vmem %s0, %s197
        %p199 = pneg %p55
        %p200 = pneg %p52
        %p201 = pneg %p76
        %p202 = pneg %p73
        %p203 = pneg %p97
        %p204 = pneg %p94
        %p205 = pneg %p118
        %p206 = pneg %p115
        %p207 = pneg %p144
        %p208 = pneg %p141
        %s209 = sand.u32 %s131, 1
        %s210 = scalar_lea.sflag [#allocation4], %s209
        %s211 = sand.u32 %s131, 1
        %s212 = scalar_lea.vmem [#allocation3], %s211
        %s213 = smul.u32 %s22, 4
        %s214 = sadd.s32 %s213, %s23
        %s215 = smul.u32 2, %s214
        %p216 = scmp.lt.s32.totalorder %s215, 15
        %s217 = scalar_select %p216, %s215, 15
        %s218 = smul.addr %s217, 4
        %s219 = scalar_lea.vmem %s0, %s218
        %s220 = smul.u32 %s22, 4
        %s221 = sadd.s32 %s220, %s23
        %s222 = smul.u32 2, %s221
        %p224 = scmp.eq.s32.totalorder %s23, 0
        // Predicated region
        $region37: #{encoder_forward.1} parent=35 // pred_check
          %p225 = pneg %p224
        $region38: #{encoder_forward.1} parent=35 // pred_check_branch
          %227 = sbr.rel (%p225) target = $region40
        $region39: #{encoder_forward.1} parent=35 // pred_region
          %228 = vst [vmem:[#allocation2] sm:$0x1] 0.0
        $region40: #{encoder_forward.1} parent=35 // pred_fallthru
          _
        %v229 = vld [vmem:[%s219] sm:$0xf]
        %v230 = vld [vmem:[%s219 + $0x4] sm:$0xf]
        %v231 = vld [vmem:[%s1] sm:$0xf]
        %v232 = vld [vmem:[%s1 + $0x4] sm:$0xf]
        %v233 = vld [vmem:[%s1 + $0x8] sm:$0xf]
        %v234 = vld [vmem:[%s1 + $0xc] sm:$0xf]
        %v237 = vunpack.c.l.b16 %v229
        %v238 = vunpack.c.l.b16 %v230
        %v239 = vpack.c.b16 %v238, %v237
        %v244 = vunpack.c.l.b16 %v231
        %v245 = vunpack.c.l.b16 %v232
        %v246 = vunpack.c.l.b16 %v233
        %v247 = vunpack.c.l.b16 %v234
        %v248 = vpack.c.b16 %v245, %v244
        %v249 = vpack.c.b16 %v247, %v246
        %vm252 = vcmask 261120
        %v254 = vsel %vm252, %v239, 0
        %256 = vmatprep.subr.bf16.mxu0 0
        %257 = vmatpush1.bf16.msra.mxu0 %v248
        %258 = vmatprep.subr.bf16.mxu0 0
        %259 = vmatpush1.bf16.msra.mxu0 %v249
        %260 = vmatprep.subr.bf16.mxu0 0
        %261 = vmatpush1.bf16.msra.mxu0 0
        %262 = vmatprep.subr.bf16.mxu0 0
        %263 = vmatpush1.bf16.msra.mxu0 0
        %264 = vmatprep.subr.bf16.mxu0 0
        %265 = vmatpush1.bf16.msra.mxu0 0
        %266 = vmatprep.subr.bf16.mxu0 0
        %267 = vmatpush1.bf16.msra.mxu0 0
        %268 = vmatprep.subr.bf16.mxu0 0
        %269 = vmatpush1.bf16.msra.mxu0 0
        %270 = vmatprep.subr.bf16.mxu0 0
        %271 = vmatpush1.bf16.msra.mxu0 0
        %272 = vmatprep.subr.bf16.mxu0 0
        %273 = vmatpush1.bf16.msra.mxu0 0
        %274 = vmatprep.subr.bf16.mxu0 0
        %275 = vmatpush1.bf16.msra.mxu0 0
        %276 = vmatprep.subr.bf16.mxu0 0
        %277 = vmatpush1.bf16.msra.mxu0 0
        %278 = vmatprep.subr.bf16.mxu0 0
        %279 = vmatpush1.bf16.msra.mxu0 0
        %280 = vmatprep.subr.bf16.mxu0 0
        %281 = vmatpush1.bf16.msra.mxu0 0
        %282 = vmatprep.subr.bf16.mxu0 0
        %283 = vmatpush1.bf16.msra.mxu0 0
        %284 = vmatprep.subr.bf16.mxu0 0
        %285 = vmatpush1.bf16.msra.mxu0 0
        %286 = vmatprep.subr.bf16.mxu0 0
        %287 = vmatpush1.bf16.msra.mxu0 0
        %288 = vmatprep.mubr.bf16.mxu0 0
        %289 = vmatmul.mubr.bf16.gmra.mrb[0].mxu0 %v254
        %v290 = vpop.f32.mrb[0].mxu0
        %v291 = vadd.f32 0.0, %v290
        %v292 = vpop.f32.mrb[0].mxu0
        %v293 = vpop.f32.mrb[0].mxu0
        %v294 = vadd.f32 0.0, %v293
        %v295 = vpop.f32.mrb[0].mxu0
        %296 = vdwg.mxu0
        %v297 = vmax.f32 %v291, 0.0
        %v298 = vmax.f32 %v294, 0.0
        %v299 = vld [vmem:[#allocation2] sm:$0x1]
        %v300 = vadd.f32 %v297, %v298
        %v301 = vrot.slane %v300, 4
        %v302 = vadd.f32 %v300, %v301
        %v303 = vrot.slane %v302, 2
        %v304 = vadd.f32 %v302, %v303
        %v305 = vrot.slane %v304, 1
        %v306 = vadd.f32 %v304, %v305
        %v307 = vadd.f32 %v299, %v306
        %308 = vst [vmem:[#allocation2] sm:$0x1] %v307
        %p309 = scmp.eq.s32.totalorder %s23, 3
        // Predicated region
        $region41: #{encoder_forward.1} parent=35 // pred_check
          %p310 = pneg %p309
        $region42: #{encoder_forward.1} parent=35 // pred_check_branch
          %312 = sbr.rel (%p310) target = $region44
        $region43: #{encoder_forward.1} parent=35 // pred_region
          %v313 = vld [vmem:[#allocation2] sm:$0x1]
          %v314 = vld [vmem:[%s2] sm:$0xff]
          %v315 = vld [vmem:[%s2 + $0x8] sm:$0xff]
          %v316 = vld [vmem:[%s2 + $0x10] sm:$0xff]
          %v317 = vld [vmem:[%s2 + $0x18] sm:$0xff]
          %v318 = vld [vmem:[%s2 + $0x20] sm:$0xff]
          %v319 = vld [vmem:[%s2 + $0x28] sm:$0xff]
          %v320 = vld [vmem:[%s2 + $0x30] sm:$0xff]
          %v321 = vld [vmem:[%s2 + $0x38] sm:$0xff]
          %v322 = vld [vmem:[%s2 + $0x40] sm:$0xff]
          %v323 = vld [vmem:[%s2 + $0x48] sm:$0xff]
          %v324 = vld [vmem:[%s2 + $0x50] sm:$0xff]
          %v325 = vld [vmem:[%s2 + $0x58] sm:$0xff]
          %v326 = vld [vmem:[%s2 + $0x60] sm:$0xff]
          %v327 = vld [vmem:[%s2 + $0x68] sm:$0xff]
          %v328 = vld [vmem:[%s2 + $0x70] sm:$0xff]
          %v329 = vld [vmem:[%s2 + $0x78] sm:$0xff]
          %v330 = vld [vmem:[%s3] sm:$0x1]
          %331 = vmatprep.subr.mxu0 0.0
          %332 = vmatpush1.msra.mxu0 %v314
          %333 = vmatprep.subr.mxu0 0.0
          %334 = vmatpush1.msra.mxu0 %v315
          %335 = vmatprep.subr.mxu0 0.0
          %336 = vmatpush1.msra.mxu0 %v316
          %337 = vmatprep.subr.mxu0 0.0
          %338 = vmatpush1.msra.mxu0 %v317
          %339 = vmatprep.subr.mxu0 0.0
          %340 = vmatpush1.msra.mxu0 %v318
          %341 = vmatprep.subr.mxu0 0.0
          %342 = vmatpush1.msra.mxu0 %v319
          %343 = vmatprep.subr.mxu0 0.0
          %344 = vmatpush1.msra.mxu0 %v320
          %345 = vmatprep.subr.mxu0 0.0
          %346 = vmatpush1.msra.mxu0 %v321
          %347 = vmatprep.subr.mxu0 0.0
          %348 = vmatpush1.msra.mxu0 %v322
          %349 = vmatprep.subr.mxu0 0.0
          %350 = vmatpush1.msra.mxu0 %v323
          %351 = vmatprep.subr.mxu0 0.0
          %352 = vmatpush1.msra.mxu0 %v324
          %353 = vmatprep.subr.mxu0 0.0
          %354 = vmatpush1.msra.mxu0 %v325
          %355 = vmatprep.subr.mxu0 0.0
          %356 = vmatpush1.msra.mxu0 %v326
          %357 = vmatprep.subr.mxu0 0.0
          %358 = vmatpush1.msra.mxu0 %v327
          %359 = vmatprep.subr.mxu0 0.0
          %360 = vmatpush1.msra.mxu0 %v328
          %361 = vmatprep.subr.mxu0 0.0
          %362 = vmatpush1.msra.mxu0 %v329
          %363 = vmatprep.subr.mxu0 0.0
          %364 = vmatpush1.msra.mxu0 0.0
          %365 = vmatprep.subr.mxu0 0.0
          %366 = vmatpush1.msra.mxu0 0.0
          %367 = vmatprep.subr.mxu0 0.0
          %368 = vmatpush1.msra.mxu0 0.0
          %369 = vmatprep.subr.mxu0 0.0
          %370 = vmatpush1.msra.mxu0 0.0
          %371 = vmatprep.subr.mxu0 0.0
          %372 = vmatpush1.msra.mxu0 0.0
          %373 = vmatprep.subr.mxu0 0.0
          %374 = vmatpush1.msra.mxu0 0.0
          %375 = vmatprep.subr.mxu0 0.0
          %376 = vmatpush1.msra.mxu0 0.0
          %377 = vmatprep.subr.mxu0 0.0
          %378 = vmatpush1.msra.mxu0 0.0
          %379 = vmatprep.subr.mxu0 0.0
          %380 = vmatpush1.msra.mxu0 0.0
          %381 = vmatprep.subr.mxu0 0.0
          %382 = vmatpush1.msra.mxu0 0.0
          %383 = vmatprep.subr.mxu0 0.0
          %384 = vmatpush1.msra.mxu0 0.0
          %385 = vmatprep.subr.mxu0 0.0
          %386 = vmatpush1.msra.mxu0 0.0
          %387 = vmatprep.subr.mxu0 0.0
          %388 = vmatpush1.msra.mxu0 0.0
          %389 = vmatprep.subr.mxu0 0.0
          %390 = vmatpush1.msra.mxu0 0.0
          %391 = vmatprep.subr.mxu0 0.0
          %392 = vmatpush1.msra.mxu0 0.0
          %393 = vmatprep.subr.mxu0 0.0
          %394 = vmatpush1.msra.mxu0 0.0
          %395 = vmatprep.mubr.f32.mxu0 0.0
          %396 = vmatmul.mubr.f32.gmra.mrb[0].mxu0 %v313
          %v397 = vpop.f32.mrb[0].mxu0
          %v398 = vadd.f32 %v330, %v397
          %v399 = vpop.f32.mrb[0].mxu0
          %400 = vdwg.mxu0
          %401 = vst [vmem:[%s212] sm:$0x1] %v398
        $region44: #{encoder_forward.1} parent=35 // pred_fallthru
          _
        %s402 = sand.u32 %s131, 1
        %s403 = scalar_lea.sflag [#allocation4], %s402
        %s404 = sand.u32 %s131, 1
        %s405 = scalar_lea.vmem [#allocation3], %s404
        // Predicated region
        $region45: #{encoder_forward.1} parent=35 // pred_check
          %p406 = pneg %p141
        $region46: #{encoder_forward.1} parent=35 // pred_check_branch
          %408 = sbr.rel (%p406) target = $region48
        $region47: #{encoder_forward.1} parent=35 // pred_region
          %s410 = ssub.s32 16, 16
          %411 = vsyncadd %s403, %s410
          %s412 = smul.addr %s22, 16
          %s413 = scalar_lea.hbm %s4, %s412
          %s415 = sshll.u32 %s405, 4
          %s416 = int_to_ptr.vmem [resolvable:$true] %s415
          %418 = dma.vmem_to_hbm [thread:$0]  %s416, 16, %s413, %s403
        $region48: #{encoder_forward.1} parent=35 // pred_fallthru
          _
      $region36: #{encoder_forward.1} parent=5 // pred_fallthru
        _
      %p419 = scmp.le.s32.totalorder 2, %s13
      // Predicated region
      $region49: #{encoder_forward.1} parent=5 // pred_check
        %p420 = pneg %p419
      $region50: #{encoder_forward.1} parent=5 // pred_check_branch
        %422 = sbr.rel (%p420) target = $region52
      $region51: #{encoder_forward.1} parent=5 // pred_region
        %s423 = ssub.s32 %s13, 2
        // Predicated region
        $region53: #{encoder_forward.1} parent=51 // pred_check
          %p424 = pneg %p147
        $region54: #{encoder_forward.1} parent=51 // pred_check_branch
          %426 = sbr.rel (%p424) target = $region56
        $region55: #{encoder_forward.1} parent=51 // pred_region
          %s427 = sand.u32 %s132, 1
          %s428 = scalar_lea.sflag [#allocation4], %s427
          %s429 = sand.u32 %s132, 1
          %s430 = scalar_lea.vmem [#allocation3], %s429
          %431 = dma.done %s428, 16
        $region56: #{encoder_forward.1} parent=51 // pred_fallthru
          _
      $region52: #{encoder_forward.1} parent=5 // pred_fallthru
        _
    $region6: #{encoder_forward.1} parent=1 // loop_footer
      %s17 = sadd.s32 1, %s13
    $region7: #{encoder_forward.1} parent=1 // loop_footer_branch
      %12 = sbr.rel target = $region3
    $region8: #{encoder_forward.1} parent=1 // loop_exit
      _
    %432 = vsyncpa [#allocation4], 1
    %s433 = scalar_lea.sflag [#allocation4], 1
    %434 = vsyncpa %s433, 1

</llo_original>
